<compile_context>
chip_gen: v5e
topology: v5e:2x2
jax: 0.10.0
libtpu: 0.0.40
codegen_flags: <defaults>
</compile_context>

<pallas_src>
import jax
import jax.numpy as jnp
from jax import lax
from jax.experimental import pallas as pl
from jax.experimental.pallas import tpu as pltpu


# --------------------------- model hyper-params ---------------------------
SEQ_LEN = 8          # args.seq_length
NUM_NODES = 8        # numNodes (== maxNumPeds for this synthetic run)
INPUT_SIZE = 2       # args.input_size (x, y position)
EMB_SIZE = 16        # args.embedding_size
GRID_SIZE = 4        # args.grid_size  -> obstacle tensor of size GRID_SIZE**2
RNN_SIZE = 32        # args.rnn_size
OUTPUT_SIZE = 5      # args.output_size (bivariate Gaussian params)
G2 = GRID_SIZE * GRID_SIZE
OUT_PAD = 128        # lane-dense padded output width (sliced back outside)

K_IN = INPUT_SIZE + G2 + 1      # fused activation width: [x | grid | 1] = 19
EW = 2 * EMB_SIZE + 1           # fused embedding width: [ie | te | 1]   = 33

MATMUL_DTYPE = jnp.bfloat16     # MXU input dtype; accumulation is always f32


# ------------------------------ Pallas kernel ------------------------------
def olstm_kernel(xg_ref, hc0_ref, wemb_ref, wih_ref, whh_ref, wout_ref,
                 bout_ref, out_ref, h_scr):
    T, N, R = SEQ_LEN, NUM_NODES, RNN_SIZE
    f32 = jnp.float32
    md = MATMUL_DTYPE

    # ---------------- prologue: two batched MXU matmuls --------------------
    # emb = [relu(x@W_ie + b_ie) | relu(g@W_te + b_te) | 1]       (T*N, 33)
    emb = jnp.maximum(
        jnp.dot(xg_ref[...], wemb_ref[...], preferred_element_type=f32), 0.0)
    # pre_gates = [inp_emb|ten_emb] @ W_ih + (b_ih + b_hh), gate columns
    # already permuted to (i, f, o, g); bias folded via the carried ones col.
    pre_gates = jnp.dot(emb.astype(md), wih_ref[...],
                        preferred_element_type=f32)            # (T*N, 4R) f32

    whh = whh_ref[...]                                          # bf16, resident
    h_f32 = hc0_ref[:, 0:R]                                     # (N, R) f32
    c = hc0_ref[:, R:2 * R]                                     # (N, R) f32
    h_bf = h_f32.astype(md)

    # ------------- serial recurrence: only h @ W_hh + gate math ------------
    for t in range(T):                                          # static unroll
        gates = (pre_gates[t * N:(t + 1) * N, :]
                 + jnp.dot(h_bf, whh, preferred_element_type=f32))
        sig = jax.nn.sigmoid(gates[:, 0:3 * R])                 # i|f|o : 1 EUP pass
        g_g = jnp.tanh(gates[:, 3 * R:4 * R])                   # g     : 1 EUP pass
        i_g = sig[:, 0:R]
        f_g = sig[:, R:2 * R]
        o_g = sig[:, 2 * R:3 * R]
        c = f_g * c + i_g * g_g
        h_f32 = o_g * jnp.tanh(c)
        h_bf = h_f32.astype(md)
        h_scr[pl.ds(t * N, N), :] = h_f32                       # row-aligned store

    # ------ epilogue: one deferred output matmul + packed [h|c] rows -------
    h_all = h_scr[...].astype(md)                               # (T*N, R) bf16
    out_main = (jnp.dot(h_all, wout_ref[...], preferred_element_type=f32)
                + bout_ref[...])                                # (T*N, 128) f32
    out_ref[pl.ds(0, T * N), :] = out_main.astype(out_ref.dtype)
    tail = jnp.concatenate(
        [h_f32, c, jnp.zeros((N, OUT_PAD - 2 * R), f32)], axis=1)   # (N, 128)
    out_ref[pl.ds(T * N, N), :] = tail.astype(out_ref.dtype)


# --------------------------- operand preparation ---------------------------
def build_operands(input_data, grids, hidden_states, cell_states, params):
    """Fuses / permutes / pads the module parameters into 7 kernel operands."""
    T, N, E, R = SEQ_LEN, NUM_NODES, EMB_SIZE, RNN_SIZE
    f32 = jnp.float32
    md = MATMUL_DTYPE

    # fused activations [x | grid | 1] (the ones column carries the biases)
    x_flat = input_data.reshape(T * N, INPUT_SIZE).astype(f32)
    g_flat = grids.reshape(T * N, G2).astype(f32)
    ones = jnp.ones((T * N, 1), f32)
    xg = jnp.concatenate([x_flat, g_flat, ones], axis=1).astype(md)  # (T*N, 19)

    # block-diagonal embedding weight; last row = [b_ie | b_te | 1]; the
    # trailing column re-emits the ones through relu so b_cell can be folded
    # into the W_ih matmul as well.
    w_emb = jnp.zeros((K_IN, EW), f32)
    w_emb = w_emb.at[0:INPUT_SIZE, 0:E].set(params["w_ie"])
    w_emb = w_emb.at[INPUT_SIZE:INPUT_SIZE + G2, E:2 * E].set(params["w_te"])
    w_emb = w_emb.at[K_IN - 1, 0:E].set(params["b_ie"][0])
    w_emb = w_emb.at[K_IN - 1, E:2 * E].set(params["b_te"][0])
    w_emb = w_emb.at[K_IN - 1, 2 * E].set(1.0)
    w_emb = w_emb.astype(md)

    # gate-column permutation (i,f,g,o) -> (i,f,o,g); identical for W_ih,
    # W_hh and the folded cell bias (consistency checked vs f32 reference).
    perm = jnp.concatenate([jnp.arange(0, 2 * R),        # i, f
                            jnp.arange(3 * R, 4 * R),    # o
                            jnp.arange(2 * R, 3 * R)])   # g
    w_ih_p = params["w_ih"][:, perm]                     # (2E, 4R)
    w_hh_p = params["w_hh"][:, perm]                     # (R, 4R)
    b_cell_p = params["b_cell"][:, perm]                 # (1, 4R)

    # W_ih extended with the folded (b_ih + b_hh) bias row
    w_ih_ext = jnp.concatenate([w_ih_p, b_cell_p], axis=0).astype(md)  # (33, 4R)
    w_hh = w_hh_p.astype(md)

    # output layer zero-padded to a lane-dense 128-wide block
    w_out = (jnp.zeros((R, OUT_PAD), f32)
             .at[:, :OUTPUT_SIZE].set(params["w_out"])).astype(md)
    b_out = (jnp.zeros((1, OUT_PAD), f32)
             .at[:, :OUTPUT_SIZE].set(params["b_out"]))

    # packed initial recurrent state [h0 | c0]
    hc0 = jnp.concatenate([hidden_states, cell_states], axis=1).astype(f32)

    return xg, hc0, w_emb, w_ih_ext, w_hh, w_out, b_out


# ------------------------------- wrapper -----------------------------------
def olstm_forward(input_data, grids, hidden_states, cell_states, params):
    """input_data: (T, N, INPUT_SIZE); grids: (T, N, G2);
       hidden_states / cell_states: (N, RNN_SIZE) f32."""
    T, N = SEQ_LEN, NUM_NODES
    f32 = jnp.float32

    operands = build_operands(input_data, grids, hidden_states, cell_states,
                              params)

    def full_spec(a):
        return pl.BlockSpec(a.shape, lambda i: (0,) * a.ndim)

    grid_spec = pltpu.PrefetchScalarGridSpec(
        num_scalar_prefetch=0,
        grid=(1,),                                       # single invocation
        in_specs=[full_spec(a) for a in operands],
        out_specs=pl.BlockSpec((T * N + N, OUT_PAD), lambda i: (0, 0)),
        scratch_shapes=[pltpu.VMEM((T * N, RNN_SIZE), jnp.float32)],
    )

    out = pl.pallas_call(
        olstm_kernel,
        out_shape=jax.ShapeDtypeStruct((T * N + N, OUT_PAD), f32),
        grid_spec=grid_spec,
        compiler_params=pltpu.CompilerParams(
            dimension_semantics=("arbitrary",)),
    )(*operands)

    outputs_return = out[:T * N, :OUTPUT_SIZE].reshape(T, N, OUTPUT_SIZE)
    h_out = out[T * N:, 0:RNN_SIZE]
    c_out = out[T * N:, RNN_SIZE:2 * RNN_SIZE]
    return outputs_return, h_out, c_out


# ----------------------- plain-JAX mirror of the kernel ---------------------
def kernel_mirror(xg, hc0, w_emb, w_ih_ext, w_hh, w_out, b_out):
    """Exactly the kernel's arithmetic (fused/permuted bf16 operands)."""
    f32 = jnp.float32
    md = MATMUL_DTYPE
    T, N, R = SEQ_LEN, NUM_NODES, RNN_SIZE
    emb = jnp.maximum(jnp.dot(xg, w_emb, preferred_element_type=f32), 0.0)
    pre_gates = jnp.dot(emb.astype(md), w_ih_ext, preferred_element_type=f32)
    h = hc0[:, :R]
    c = hc0[:, R:2 * R]
    h_bf = h.astype(md)
    hs = []
    for t in range(T):
        gates = (pre_gates[t * N:(t + 1) * N]
                 + jnp.dot(h_bf, w_hh, preferred_element_type=f32))
        sig = jax.nn.sigmoid(gates[:, :3 * R])
        g_g = jnp.tanh(gates[:, 3 * R:])
        c = sig[:, R:2 * R] * c + sig[:, :R] * g_g
        h = sig[:, 2 * R:3 * R] * jnp.tanh(c)
        h_bf = h.astype(md)
        hs.append(h_bf)
    h_all = jnp.concatenate(hs, axis=0)
    out = jnp.dot(h_all, w_out, preferred_element_type=f32) + b_out
    return out[:, :OUTPUT_SIZE].reshape(T, N, OUTPUT_SIZE), h, c


# ------------------------- pure-f32 module reference ------------------------
def olstm_reference(input_data, grids, h0, c0, p):
    """Original module semantics in plain f32 JAX (PyTorch gate order i,f,g,o,
       un-fused / un-permuted weights) — catches any fusion/permutation bug."""
    R = RNN_SIZE

    def step(carry, inputs):
        h, c = carry
        x, g = inputs
        inp_emb = jnp.maximum(x @ p["w_ie"] + p["b_ie"], 0.0)
        ten_emb = jnp.maximum(g @ p["w_te"] + p["b_te"], 0.0)
        cat = jnp.concatenate([inp_emb, ten_emb], axis=1)
        gates = cat @ p["w_ih"] + h @ p["w_hh"] + p["b_cell"]
        i_g = jax.nn.sigmoid(gates[:, :R])
        f_g = jax.nn.sigmoid(gates[:, R:2 * R])
        g_g = jnp.tanh(gates[:, 2 * R:3 * R])
        o_g = jax.nn.sigmoid(gates[:, 3 * R:])
        c_new = f_g * c + i_g * g_g
        h_new = o_g * jnp.tanh(c_new)
        out = h_new @ p["w_out"] + p["b_out"]
        return (h_new, c_new), out

    (h_fin, c_fin), outs = lax.scan(step, (h0, c0), (input_data, grids))
    return outs, h_fin, c_fin


# ---------------------------------- main ----------------------------------
if __name__ == "__main__":
    key = jax.random.PRNGKey(0)
    ks = jax.random.split(key, 16)

    def init(k, shape, scale=0.1):
        return (scale * jax.random.normal(k, shape)).astype(jnp.float32)

    params = {
        "w_ie":   init(ks[0], (INPUT_SIZE, EMB_SIZE)),
        "b_ie":   init(ks[1], (1, EMB_SIZE)),
        "w_te":   init(ks[2], (G2, EMB_SIZE)),
        "b_te":   init(ks[3], (1, EMB_SIZE)),
        "w_ih":   init(ks[4], (2 * EMB_SIZE, 4 * RNN_SIZE)),
        "w_hh":   init(ks[5], (RNN_SIZE, 4 * RNN_SIZE)),
        "b_cell": init(ks[6], (1, 4 * RNN_SIZE)),   # b_ih + b_hh folded together
        "w_out":  init(ks[7], (RNN_SIZE, OUTPUT_SIZE)),
        "b_out":  init(ks[8], (1, OUTPUT_SIZE)),
    }

    input_data = init(ks[9], (SEQ_LEN, NUM_NODES, INPUT_SIZE), scale=1.0)
    grids = (jax.random.uniform(ks[10], (SEQ_LEN, NUM_NODES, G2)) > 0.5
             ).astype(jnp.float32)                  # binary obstacle grid masks
    hidden_states = init(ks[11], (NUM_NODES, RNN_SIZE), scale=0.5)
    cell_states = init(ks[12], (NUM_NODES, RNN_SIZE), scale=0.5)

    outs, h_out, c_out = olstm_forward(
        input_data, grids, hidden_states, cell_states, params)
    jax.block_until_ready((outs, h_out, c_out))

    # (1) tight check vs a plain-JAX mirror of the exact kernel arithmetic
    operands = build_operands(input_data, grids, hidden_states, cell_states,
                              params)
    m_outs, m_h, m_c = kernel_mirror(*operands)
    assert jnp.allclose(outs, m_outs, atol=5e-3, rtol=5e-3)
    assert jnp.allclose(h_out, m_h, atol=5e-3, rtol=5e-3)
    assert jnp.allclose(c_out, m_c, atol=5e-3, rtol=5e-3)

    # (2) loose check vs pure-f32 module semantics (only bf16 matmul/bias
    #     rounding) — also validates the gate permutation / weight fusion
    r_outs, r_h, r_c = olstm_reference(
        input_data, grids, hidden_states, cell_states, params)
    assert jnp.allclose(outs, r_outs, atol=5e-2, rtol=5e-2)
    assert jnp.allclose(h_out, r_h, atol=5e-2, rtol=5e-2)
    assert jnp.allclose(c_out, r_c, atol=5e-2, rtol=5e-2)

    print("KERNEL_OK")
</pallas_src>

<mosaic_0001>
module attributes {stable_mosaic.version = 11 : i64} {
  func.func @olstm_kernel(%arg0: i32, %arg1: memref<64x19xbf16, #tpu.memory_space<vmem>>, %arg2: memref<8x64xf32, #tpu.memory_space<vmem>>, %arg3: memref<19x33xbf16, #tpu.memory_space<vmem>>, %arg4: memref<33x128xbf16, #tpu.memory_space<vmem>>, %arg5: memref<32x128xbf16, #tpu.memory_space<vmem>>, %arg6: memref<32x128xbf16, #tpu.memory_space<vmem>>, %arg7: memref<1x128xf32, #tpu.memory_space<vmem>>, %arg8: memref<72x128xf32, #tpu.memory_space<vmem>>, %arg9: memref<64x32xf32, #tpu.memory_space<vmem>>) attributes {dimension_semantics = [#tpu.dimension_semantics<arbitrary>], iteration_bounds = array<i64: 1>, scalar_prefetch = 0 : i64, scratch_operands = 1 : i64, tpu.core_type = #tpu.core_type<tc>, window_params = [{pipeline_mode = #tpu.pipeline_mode<synchronous>, transform_indices = @transform_0, window_bounds = array<i64: 64, 19>}, {pipeline_mode = #tpu.pipeline_mode<synchronous>, transform_indices = @transform_1, window_bounds = array<i64: 8, 64>}, {pipeline_mode = #tpu.pipeline_mode<synchronous>, transform_indices = @transform_2, window_bounds = array<i64: 19, 33>}, {pipeline_mode = #tpu.pipeline_mode<synchronous>, transform_indices = @transform_3, window_bounds = array<i64: 33, 128>}, {pipeline_mode = #tpu.pipeline_mode<synchronous>, transform_indices = @transform_4, window_bounds = array<i64: 32, 128>}, {pipeline_mode = #tpu.pipeline_mode<synchronous>, transform_indices = @transform_5, window_bounds = array<i64: 32, 128>}, {pipeline_mode = #tpu.pipeline_mode<synchronous>, transform_indices = @transform_6, window_bounds = array<i64: 1, 128>}, {pipeline_mode = #tpu.pipeline_mode<synchronous>, transform_indices = @transform_7, window_bounds = array<i64: 72, 128>}]} {
    %c0 = arith.constant 0 : index
    %c0_0 = arith.constant 0 : index
    %0 = vector.load %arg1[%c0, %c0_0] : memref<64x19xbf16, #tpu.memory_space<vmem>>, vector<64x19xbf16>
    %c0_1 = arith.constant 0 : index
    %c0_2 = arith.constant 0 : index
    %1 = vector.load %arg3[%c0_1, %c0_2] : memref<19x33xbf16, #tpu.memory_space<vmem>>, vector<19x33xbf16>
    %cst = arith.constant dense<0.000000e+00> : vector<64x33xf32>
    %2 = tpu.matmul %0, %1, %cst {dimension_numbers = #tpu.dot_dimension_numbers<[1], [0], [0], [1], [0, 0, 1, 1], [], []>} : vector<64x19xbf16>, vector<19x33xbf16>, vector<64x33xf32> -> vector<64x33xf32>
    %cst_3 = arith.constant 0.000000e+00 : f32
    %3 = vector.broadcast %cst_3 : f32 to vector<64x33xf32>
    %4 = arith.maximumf %2, %3 : vector<64x33xf32>
    %5 = arith.truncf %4 : vector<64x33xf32> to vector<64x33xbf16>
    %c0_4 = arith.constant 0 : index
    %c0_5 = arith.constant 0 : index
    %6 = vector.load %arg4[%c0_4, %c0_5] : memref<33x128xbf16, #tpu.memory_space<vmem>>, vector<33x128xbf16>
    %cst_6 = arith.constant dense<0.000000e+00> : vector<64x128xf32>
    %7 = tpu.matmul %5, %6, %cst_6 {dimension_numbers = #tpu.dot_dimension_numbers<[1], [0], [0], [1], [0, 0, 1, 1], [], []>} : vector<64x33xbf16>, vector<33x128xbf16>, vector<64x128xf32> -> vector<64x128xf32>
    %c0_7 = arith.constant 0 : index
    %c0_8 = arith.constant 0 : index
    %8 = vector.load %arg5[%c0_7, %c0_8] : memref<32x128xbf16, #tpu.memory_space<vmem>>, vector<32x128xbf16>
    %c0_9 = arith.constant 0 : index
    %c0_10 = arith.constant 0 : index
    %9 = vector.load %arg2[%c0_9, %c0_10] : memref<8x64xf32, #tpu.memory_space<vmem>>, vector<8x32xf32>
    %c0_11 = arith.constant 0 : index
    %c32 = arith.constant 32 : index
    %10 = vector.load %arg2[%c0_11, %c32] : memref<8x64xf32, #tpu.memory_space<vmem>>, vector<8x32xf32>
    %11 = arith.truncf %9 : vector<8x32xf32> to vector<8x32xbf16>
    %12 = vector.extract_strided_slice %7 {offsets = [0, 0], sizes = [8, 128], strides = [1, 1]} : vector<64x128xf32> to vector<8x128xf32>
    %cst_12 = arith.constant dense<0.000000e+00> : vector<8x128xf32>
    %13 = tpu.matmul %11, %8, %cst_12 {dimension_numbers = #tpu.dot_dimension_numbers<[1], [0], [0], [1], [0, 0, 1, 1], [], []>} : vector<8x32xbf16>, vector<32x128xbf16>, vector<8x128xf32> -> vector<8x128xf32>
    %14 = arith.addf %12, %13 : vector<8x128xf32>
    %15 = vector.extract_strided_slice %14 {offsets = [0, 0], sizes = [8, 96], strides = [1, 1]} : vector<8x128xf32> to vector<8x96xf32>
    %16 = arith.negf %15 : vector<8x96xf32>
    %17 = math.exp %16 : vector<8x96xf32>
    %cst_13 = arith.constant 1.000000e+00 : f32
    %18 = vector.broadcast %cst_13 : f32 to vector<8x96xf32>
    %19 = arith.addf %18, %17 : vector<8x96xf32>
    %20 = arith.divf %18, %19 : vector<8x96xf32>
    %21 = vector.extract_strided_slice %14 {offsets = [0, 96], sizes = [8, 32], strides = [1, 1]} : vector<8x128xf32> to vector<8x32xf32>
    %22 = math.tanh %21 : vector<8x32xf32>
    %23 = vector.extract_strided_slice %20 {offsets = [0, 0], sizes = [8, 32], strides = [1, 1]} : vector<8x96xf32> to vector<8x32xf32>
    %24 = vector.extract_strided_slice %20 {offsets = [0, 32], sizes = [8, 32], strides = [1, 1]} : vector<8x96xf32> to vector<8x32xf32>
    %25 = vector.extract_strided_slice %20 {offsets = [0, 64], sizes = [8, 32], strides = [1, 1]} : vector<8x96xf32> to vector<8x32xf32>
    %26 = arith.mulf %24, %10 : vector<8x32xf32>
    %27 = arith.mulf %23, %22 : vector<8x32xf32>
    %28 = arith.addf %26, %27 : vector<8x32xf32>
    %29 = math.tanh %28 : vector<8x32xf32>
    %30 = arith.mulf %25, %29 : vector<8x32xf32>
    %31 = arith.truncf %30 : vector<8x32xf32> to vector<8x32xbf16>
    %c0_14 = arith.constant 0 : index
    %c0_15 = arith.constant 0 : index
    %32 = vector.load %arg9[%c0_14, %c0_15] : memref<64x32xf32, #tpu.memory_space<vmem>>, vector<8x32xf32>
    tpu.vector_store %arg9[%c0_14, %c0_15], %30 {strides = array<i32>} : memref<64x32xf32, #tpu.memory_space<vmem>>, vector<8x32xf32>,
    %33 = vector.extract_strided_slice %7 {offsets = [8, 0], sizes = [8, 128], strides = [1, 1]} : vector<64x128xf32> to vector<8x128xf32>
    %cst_16 = arith.constant dense<0.000000e+00> : vector<8x128xf32>
    %34 = tpu.matmul %31, %8, %cst_16 {dimension_numbers = #tpu.dot_dimension_numbers<[1], [0], [0], [1], [0, 0, 1, 1], [], []>} : vector<8x32xbf16>, vector<32x128xbf16>, vector<8x128xf32> -> vector<8x128xf32>
    %35 = arith.addf %33, %34 : vector<8x128xf32>
    %36 = vector.extract_strided_slice %35 {offsets = [0, 0], sizes = [8, 96], strides = [1, 1]} : vector<8x128xf32> to vector<8x96xf32>
    %37 = arith.negf %36 : vector<8x96xf32>
    %38 = math.exp %37 : vector<8x96xf32>
    %cst_17 = arith.constant 1.000000e+00 : f32
    %39 = vector.broadcast %cst_17 : f32 to vector<8x96xf32>
    %40 = arith.addf %39, %38 : vector<8x96xf32>
    %41 = arith.divf %39, %40 : vector<8x96xf32>
    %42 = vector.extract_strided_slice %35 {offsets = [0, 96], sizes = [8, 32], strides = [1, 1]} : vector<8x128xf32> to vector<8x32xf32>
    %43 = math.tanh %42 : vector<8x32xf32>
    %44 = vector.extract_strided_slice %41 {offsets = [0, 0], sizes = [8, 32], strides = [1, 1]} : vector<8x96xf32> to vector<8x32xf32>
    %45 = vector.extract_strided_slice %41 {offsets = [0, 32], sizes = [8, 32], strides = [1, 1]} : vector<8x96xf32> to vector<8x32xf32>
    %46 = vector.extract_strided_slice %41 {offsets = [0, 64], sizes = [8, 32], strides = [1, 1]} : vector<8x96xf32> to vector<8x32xf32>
    %47 = arith.mulf %45, %28 : vector<8x32xf32>
    %48 = arith.mulf %44, %43 : vector<8x32xf32>
    %49 = arith.addf %47, %48 : vector<8x32xf32>
    %50 = math.tanh %49 : vector<8x32xf32>
    %51 = arith.mulf %46, %50 : vector<8x32xf32>
    %52 = arith.truncf %51 : vector<8x32xf32> to vector<8x32xbf16>
    %c8 = arith.constant 8 : index
    %c0_18 = arith.constant 0 : index
    %53 = vector.load %arg9[%c8, %c0_18] : memref<64x32xf32, #tpu.memory_space<vmem>>, vector<8x32xf32>
    tpu.vector_store %arg9[%c8, %c0_18], %51 {strides = array<i32>} : memref<64x32xf32, #tpu.memory_space<vmem>>, vector<8x32xf32>,
    %54 = vector.extract_strided_slice %7 {offsets = [16, 0], sizes = [8, 128], strides = [1, 1]} : vector<64x128xf32> to vector<8x128xf32>
    %cst_19 = arith.constant dense<0.000000e+00> : vector<8x128xf32>
    %55 = tpu.matmul %52, %8, %cst_19 {dimension_numbers = #tpu.dot_dimension_numbers<[1], [0], [0], [1], [0, 0, 1, 1], [], []>} : vector<8x32xbf16>, vector<32x128xbf16>, vector<8x128xf32> -> vector<8x128xf32>
    %56 = arith.addf %54, %55 : vector<8x128xf32>
    %57 = vector.extract_strided_slice %56 {offsets = [0, 0], sizes = [8, 96], strides = [1, 1]} : vector<8x128xf32> to vector<8x96xf32>
    %58 = arith.negf %57 : vector<8x96xf32>
    %59 = math.exp %58 : vector<8x96xf32>
    %cst_20 = arith.constant 1.000000e+00 : f32
    %60 = vector.broadcast %cst_20 : f32 to vector<8x96xf32>
    %61 = arith.addf %60, %59 : vector<8x96xf32>
    %62 = arith.divf %60, %61 : vector<8x96xf32>
    %63 = vector.extract_strided_slice %56 {offsets = [0, 96], sizes = [8, 32], strides = [1, 1]} : vector<8x128xf32> to vector<8x32xf32>
    %64 = math.tanh %63 : vector<8x32xf32>
    %65 = vector.extract_strided_slice %62 {offsets = [0, 0], sizes = [8, 32], strides = [1, 1]} : vector<8x96xf32> to vector<8x32xf32>
    %66 = vector.extract_strided_slice %62 {offsets = [0, 32], sizes = [8, 32], strides = [1, 1]} : vector<8x96xf32> to vector<8x32xf32>
    %67 = vector.extract_strided_slice %62 {offsets = [0, 64], sizes = [8, 32], strides = [1, 1]} : vector<8x96xf32> to vector<8x32xf32>
    %68 = arith.mulf %66, %49 : vector<8x32xf32>
    %69 = arith.mulf %65, %64 : vector<8x32xf32>
    %70 = arith.addf %68, %69 : vector<8x32xf32>
    %71 = math.tanh %70 : vector<8x32xf32>
    %72 = arith.mulf %67, %71 : vector<8x32xf32>
    %73 = arith.truncf %72 : vector<8x32xf32> to vector<8x32xbf16>
    %c16 = arith.constant 16 : index
    %c0_21 = arith.constant 0 : index
    %74 = vector.load %arg9[%c16, %c0_21] : memref<64x32xf32, #tpu.memory_space<vmem>>, vector<8x32xf32>
    tpu.vector_store %arg9[%c16, %c0_21], %72 {strides = array<i32>} : memref<64x32xf32, #tpu.memory_space<vmem>>, vector<8x32xf32>,
    %75 = vector.extract_strided_slice %7 {offsets = [24, 0], sizes = [8, 128], strides = [1, 1]} : vector<64x128xf32> to vector<8x128xf32>
    %cst_22 = arith.constant dense<0.000000e+00> : vector<8x128xf32>
    %76 = tpu.matmul %73, %8, %cst_22 {dimension_numbers = #tpu.dot_dimension_numbers<[1], [0], [0], [1], [0, 0, 1, 1], [], []>} : vector<8x32xbf16>, vector<32x128xbf16>, vector<8x128xf32> -> vector<8x128xf32>
    %77 = arith.addf %75, %76 : vector<8x128xf32>
    %78 = vector.extract_strided_slice %77 {offsets = [0, 0], sizes = [8, 96], strides = [1, 1]} : vector<8x128xf32> to vector<8x96xf32>
    %79 = arith.negf %78 : vector<8x96xf32>
    %80 = math.exp %79 : vector<8x96xf32>
    %cst_23 = arith.constant 1.000000e+00 : f32
    %81 = vector.broadcast %cst_23 : f32 to vector<8x96xf32>
    %82 = arith.addf %81, %80 : vector<8x96xf32>
    %83 = arith.divf %81, %82 : vector<8x96xf32>
    %84 = vector.extract_strided_slice %77 {offsets = [0, 96], sizes = [8, 32], strides = [1, 1]} : vector<8x128xf32> to vector<8x32xf32>
    %85 = math.tanh %84 : vector<8x32xf32>
    %86 = vector.extract_strided_slice %83 {offsets = [0, 0], sizes = [8, 32], strides = [1, 1]} : vector<8x96xf32> to vector<8x32xf32>
    %87 = vector.extract_strided_slice %83 {offsets = [0, 32], sizes = [8, 32], strides = [1, 1]} : vector<8x96xf32> to vector<8x32xf32>
    %88 = vector.extract_strided_slice %83 {offsets = [0, 64], sizes = [8, 32], strides = [1, 1]} : vector<8x96xf32> to vector<8x32xf32>
    %89 = arith.mulf %87, %70 : vector<8x32xf32>
    %90 = arith.mulf %86, %85 : vector<8x32xf32>
    %91 = arith.addf %89, %90 : vector<8x32xf32>
    %92 = math.tanh %91 : vector<8x32xf32>
    %93 = arith.mulf %88, %92 : vector<8x32xf32>
    %94 = arith.truncf %93 : vector<8x32xf32> to vector<8x32xbf16>
    %c24 = arith.constant 24 : index
    %c0_24 = arith.constant 0 : index
    %95 = vector.load %arg9[%c24, %c0_24] : memref<64x32xf32, #tpu.memory_space<vmem>>, vector<8x32xf32>
    tpu.vector_store %arg9[%c24, %c0_24], %93 {strides = array<i32>} : memref<64x32xf32, #tpu.memory_space<vmem>>, vector<8x32xf32>,
    %96 = vector.extract_strided_slice %7 {offsets = [32, 0], sizes = [8, 128], strides = [1, 1]} : vector<64x128xf32> to vector<8x128xf32>
    %cst_25 = arith.constant dense<0.000000e+00> : vector<8x128xf32>
    %97 = tpu.matmul %94, %8, %cst_25 {dimension_numbers = #tpu.dot_dimension_numbers<[1], [0], [0], [1], [0, 0, 1, 1], [], []>} : vector<8x32xbf16>, vector<32x128xbf16>, vector<8x128xf32> -> vector<8x128xf32>
    %98 = arith.addf %96, %97 : vector<8x128xf32>
    %99 = vector.extract_strided_slice %98 {offsets = [0, 0], sizes = [8, 96], strides = [1, 1]} : vector<8x128xf32> to vector<8x96xf32>
    %100 = arith.negf %99 : vector<8x96xf32>
    %101 = math.exp %100 : vector<8x96xf32>
    %cst_26 = arith.constant 1.000000e+00 : f32
    %102 = vector.broadcast %cst_26 : f32 to vector<8x96xf32>
    %103 = arith.addf %102, %101 : vector<8x96xf32>
    %104 = arith.divf %102, %103 : vector<8x96xf32>
    %105 = vector.extract_strided_slice %98 {offsets = [0, 96], sizes = [8, 32], strides = [1, 1]} : vector<8x128xf32> to vector<8x32xf32>
    %106 = math.tanh %105 : vector<8x32xf32>
    %107 = vector.extract_strided_slice %104 {offsets = [0, 0], sizes = [8, 32], strides = [1, 1]} : vector<8x96xf32> to vector<8x32xf32>
    %108 = vector.extract_strided_slice %104 {offsets = [0, 32], sizes = [8, 32], strides = [1, 1]} : vector<8x96xf32> to vector<8x32xf32>
    %109 = vector.extract_strided_slice %104 {offsets = [0, 64], sizes = [8, 32], strides = [1, 1]} : vector<8x96xf32> to vector<8x32xf32>
    %110 = arith.mulf %108, %91 : vector<8x32xf32>
    %111 = arith.mulf %107, %106 : vector<8x32xf32>
    %112 = arith.addf %110, %111 : vector<8x32xf32>
    %113 = math.tanh %112 : vector<8x32xf32>
    %114 = arith.mulf %109, %113 : vector<8x32xf32>
    %115 = arith.truncf %114 : vector<8x32xf32> to vector<8x32xbf16>
    %c32_27 = arith.constant 32 : index
    %c0_28 = arith.constant 0 : index
    %116 = vector.load %arg9[%c32_27, %c0_28] : memref<64x32xf32, #tpu.memory_space<vmem>>, vector<8x32xf32>
    tpu.vector_store %arg9[%c32_27, %c0_28], %114 {strides = array<i32>} : memref<64x32xf32, #tpu.memory_space<vmem>>, vector<8x32xf32>,
    %117 = vector.extract_strided_slice %7 {offsets = [40, 0], sizes = [8, 128], strides = [1, 1]} : vector<64x128xf32> to vector<8x128xf32>
    %cst_29 = arith.constant dense<0.000000e+00> : vector<8x128xf32>
    %118 = tpu.matmul %115, %8, %cst_29 {dimension_numbers = #tpu.dot_dimension_numbers<[1], [0], [0], [1], [0, 0, 1, 1], [], []>} : vector<8x32xbf16>, vector<32x128xbf16>, vector<8x128xf32> -> vector<8x128xf32>
    %119 = arith.addf %117, %118 : vector<8x128xf32>
    %120 = vector.extract_strided_slice %119 {offsets = [0, 0], sizes = [8, 96], strides = [1, 1]} : vector<8x128xf32> to vector<8x96xf32>
    %121 = arith.negf %120 : vector<8x96xf32>
    %122 = math.exp %121 : vector<8x96xf32>
    %cst_30 = arith.constant 1.000000e+00 : f32
    %123 = vector.broadcast %cst_30 : f32 to vector<8x96xf32>
    %124 = arith.addf %123, %122 : vector<8x96xf32>
    %125 = arith.divf %123, %124 : vector<8x96xf32>
    %126 = vector.extract_strided_slice %119 {offsets = [0, 96], sizes = [8, 32], strides = [1, 1]} : vector<8x128xf32> to vector<8x32xf32>
    %127 = math.tanh %126 : vector<8x32xf32>
    %128 = vector.extract_strided_slice %125 {offsets = [0, 0], sizes = [8, 32], strides = [1, 1]} : vector<8x96xf32> to vector<8x32xf32>
    %129 = vector.extract_strided_slice %125 {offsets = [0, 32], sizes = [8, 32], strides = [1, 1]} : vector<8x96xf32> to vector<8x32xf32>
    %130 = vector.extract_strided_slice %125 {offsets = [0, 64], sizes = [8, 32], strides = [1, 1]} : vector<8x96xf32> to vector<8x32xf32>
    %131 = arith.mulf %129, %112 : vector<8x32xf32>
    %132 = arith.mulf %128, %127 : vector<8x32xf32>
    %133 = arith.addf %131, %132 : vector<8x32xf32>
    %134 = math.tanh %133 : vector<8x32xf32>
    %135 = arith.mulf %130, %134 : vector<8x32xf32>
    %136 = arith.truncf %135 : vector<8x32xf32> to vector<8x32xbf16>
    %c40 = arith.constant 40 : index
    %c0_31 = arith.constant 0 : index
    %137 = vector.load %arg9[%c40, %c0_31] : memref<64x32xf32, #tpu.memory_space<vmem>>, vector<8x32xf32>
    tpu.vector_store %arg9[%c40, %c0_31], %135 {strides = array<i32>} : memref<64x32xf32, #tpu.memory_space<vmem>>, vector<8x32xf32>,
    %138 = vector.extract_strided_slice %7 {offsets = [48, 0], sizes = [8, 128], strides = [1, 1]} : vector<64x128xf32> to vector<8x128xf32>
    %cst_32 = arith.constant dense<0.000000e+00> : vector<8x128xf32>
    %139 = tpu.matmul %136, %8, %cst_32 {dimension_numbers = #tpu.dot_dimension_numbers<[1], [0], [0], [1], [0, 0, 1, 1], [], []>} : vector<8x32xbf16>, vector<32x128xbf16>, vector<8x128xf32> -> vector<8x128xf32>
    %140 = arith.addf %138, %139 : vector<8x128xf32>
    %141 = vector.extract_strided_slice %140 {offsets = [0, 0], sizes = [8, 96], strides = [1, 1]} : vector<8x128xf32> to vector<8x96xf32>
    %142 = arith.negf %141 : vector<8x96xf32>
    %143 = math.exp %142 : vector<8x96xf32>
    %cst_33 = arith.constant 1.000000e+00 : f32
    %144 = vector.broadcast %cst_33 : f32 to vector<8x96xf32>
    %145 = arith.addf %144, %143 : vector<8x96xf32>
    %146 = arith.divf %144, %145 : vector<8x96xf32>
    %147 = vector.extract_strided_slice %140 {offsets = [0, 96], sizes = [8, 32], strides = [1, 1]} : vector<8x128xf32> to vector<8x32xf32>
    %148 = math.tanh %147 : vector<8x32xf32>
    %149 = vector.extract_strided_slice %146 {offsets = [0, 0], sizes = [8, 32], strides = [1, 1]} : vector<8x96xf32> to vector<8x32xf32>
    %150 = vector.extract_strided_slice %146 {offsets = [0, 32], sizes = [8, 32], strides = [1, 1]} : vector<8x96xf32> to vector<8x32xf32>
    %151 = vector.extract_strided_slice %146 {offsets = [0, 64], sizes = [8, 32], strides = [1, 1]} : vector<8x96xf32> to vector<8x32xf32>
    %152 = arith.mulf %150, %133 : vector<8x32xf32>
    %153 = arith.mulf %149, %148 : vector<8x32xf32>
    %154 = arith.addf %152, %153 : vector<8x32xf32>
    %155 = math.tanh %154 : vector<8x32xf32>
    %156 = arith.mulf %151, %155 : vector<8x32xf32>
    %157 = arith.truncf %156 : vector<8x32xf32> to vector<8x32xbf16>
    %c48 = arith.constant 48 : index
    %c0_34 = arith.constant 0 : index
    %158 = vector.load %arg9[%c48, %c0_34] : memref<64x32xf32, #tpu.memory_space<vmem>>, vector<8x32xf32>
    tpu.vector_store %arg9[%c48, %c0_34], %156 {strides = array<i32>} : memref<64x32xf32, #tpu.memory_space<vmem>>, vector<8x32xf32>,
    %159 = vector.extract_strided_slice %7 {offsets = [56, 0], sizes = [8, 128], strides = [1, 1]} : vector<64x128xf32> to vector<8x128xf32>
    %cst_35 = arith.constant dense<0.000000e+00> : vector<8x128xf32>
    %160 = tpu.matmul %157, %8, %cst_35 {dimension_numbers = #tpu.dot_dimension_numbers<[1], [0], [0], [1], [0, 0, 1, 1], [], []>} : vector<8x32xbf16>, vector<32x128xbf16>, vector<8x128xf32> -> vector<8x128xf32>
    %161 = arith.addf %159, %160 : vector<8x128xf32>
    %162 = vector.extract_strided_slice %161 {offsets = [0, 0], sizes = [8, 96], strides = [1, 1]} : vector<8x128xf32> to vector<8x96xf32>
    %163 = arith.negf %162 : vector<8x96xf32>
    %164 = math.exp %163 : vector<8x96xf32>
    %cst_36 = arith.constant 1.000000e+00 : f32
    %165 = vector.broadcast %cst_36 : f32 to vector<8x96xf32>
    %166 = arith.addf %165, %164 : vector<8x96xf32>
    %167 = arith.divf %165, %166 : vector<8x96xf32>
    %168 = vector.extract_strided_slice %161 {offsets = [0, 96], sizes = [8, 32], strides = [1, 1]} : vector<8x128xf32> to vector<8x32xf32>
    %169 = math.tanh %168 : vector<8x32xf32>
    %170 = vector.extract_strided_slice %167 {offsets = [0, 0], sizes = [8, 32], strides = [1, 1]} : vector<8x96xf32> to vector<8x32xf32>
    %171 = vector.extract_strided_slice %167 {offsets = [0, 32], sizes = [8, 32], strides = [1, 1]} : vector<8x96xf32> to vector<8x32xf32>
    %172 = vector.extract_strided_slice %167 {offsets = [0, 64], sizes = [8, 32], strides = [1, 1]} : vector<8x96xf32> to vector<8x32xf32>
    %173 = arith.mulf %171, %154 : vector<8x32xf32>
    %174 = arith.mulf %170, %169 : vector<8x32xf32>
    %175 = arith.addf %173, %174 : vector<8x32xf32>
    %176 = math.tanh %175 : vector<8x32xf32>
    %177 = arith.mulf %172, %176 : vector<8x32xf32>
    %c56 = arith.constant 56 : index
    %c0_37 = arith.constant 0 : index
    %178 = vector.load %arg9[%c56, %c0_37] : memref<64x32xf32, #tpu.memory_space<vmem>>, vector<8x32xf32>
    tpu.vector_store %arg9[%c56, %c0_37], %177 {strides = array<i32>} : memref<64x32xf32, #tpu.memory_space<vmem>>, vector<8x32xf32>,
    %c0_38 = arith.constant 0 : index
    %c0_39 = arith.constant 0 : index
    %179 = vector.load %arg9[%c0_38, %c0_39] : memref<64x32xf32, #tpu.memory_space<vmem>>, vector<64x32xf32>
    %180 = arith.truncf %179 : vector<64x32xf32> to vector<64x32xbf16>
    %c0_40 = arith.constant 0 : index
    %c0_41 = arith.constant 0 : index
    %181 = vector.load %arg6[%c0_40, %c0_41] : memref<32x128xbf16, #tpu.memory_space<vmem>>, vector<32x128xbf16>
    %cst_42 = arith.constant dense<0.000000e+00> : vector<64x128xf32>
    %182 = tpu.matmul %180, %181, %cst_42 {dimension_numbers = #tpu.dot_dimension_numbers<[1], [0], [0], [1], [0, 0, 1, 1], [], []>} : vector<64x32xbf16>, vector<32x128xbf16>, vector<64x128xf32> -> vector<64x128xf32>
    %c0_43 = arith.constant 0 : index
    %c0_44 = arith.constant 0 : index
    %183 = vector.load %arg7[%c0_43, %c0_44] : memref<1x128xf32, #tpu.memory_space<vmem>>, vector<1x128xf32>
    %184 = vector.broadcast %183 : vector<1x128xf32> to vector<64x128xf32>
    %185 = arith.addf %182, %184 : vector<64x128xf32>
    %c0_45 = arith.constant 0 : index
    %c0_46 = arith.constant 0 : index
    %186 = vector.load %arg8[%c0_45, %c0_46] : memref<72x128xf32, #tpu.memory_space<vmem>>, vector<64x128xf32>
    tpu.vector_store %arg8[%c0_45, %c0_46], %185 {strides = array<i32>} : memref<72x128xf32, #tpu.memory_space<vmem>>, vector<64x128xf32>,
    %cst_47 = arith.constant 0.000000e+00 : f32
    %187 = vector.broadcast %cst_47 : f32 to vector<8x64xf32>
    %188 = tpu.concatenate %177, %175, %187 in 1 : vector<8x32xf32>, vector<8x32xf32>, vector<8x64xf32> -> vector<8x128xf32>
    %c64 = arith.constant 64 : index
    %c0_48 = arith.constant 0 : index
    %189 = vector.load %arg8[%c64, %c0_48] : memref<72x128xf32, #tpu.memory_space<vmem>>, vector<8x128xf32>
    tpu.vector_store %arg8[%c64, %c0_48], %188 {strides = array<i32>} : memref<72x128xf32, #tpu.memory_space<vmem>>, vector<8x128xf32>,
    return
  }
  func.func @transform_0(%arg0: i32) -> (i32, i32) {
    %c0_i32 = arith.constant 0 : i32
    %c0_i32_0 = arith.constant 0 : i32
    %c0_i32_1 = arith.constant 0 : i32
    return %c0_i32, %c0_i32_0 : i32, i32
  }
  func.func @transform_1(%arg0: i32) -> (i32, i32) {
    %c0_i32 = arith.constant 0 : i32
    %c0_i32_0 = arith.constant 0 : i32
    %c0_i32_1 = arith.constant 0 : i32
    return %c0_i32, %c0_i32_0 : i32, i32
  }
  func.func @transform_2(%arg0: i32) -> (i32, i32) {
    %c0_i32 = arith.constant 0 : i32
    %c0_i32_0 = arith.constant 0 : i32
    %c0_i32_1 = arith.constant 0 : i32
    return %c0_i32, %c0_i32_0 : i32, i32
  }
  func.func @transform_3(%arg0: i32) -> (i32, i32) {
    %c0_i32 = arith.constant 0 : i32
    %c0_i32_0 = arith.constant 0 : i32
    %c0_i32_1 = arith.constant 0 : i32
    return %c0_i32, %c0_i32_0 : i32, i32
  }
  func.func @transform_4(%arg0: i32) -> (i32, i32) {
    %c0_i32 = arith.constant 0 : i32
    %c0_i32_0 = arith.constant 0 : i32
    %c0_i32_1 = arith.constant 0 : i32
    return %c0_i32, %c0_i32_0 : i32, i32
  }
  func.func @transform_5(%arg0: i32) -> (i32, i32) {
    %c0_i32 = arith.constant 0 : i32
    %c0_i32_0 = arith.constant 0 : i32
    %c0_i32_1 = arith.constant 0 : i32
    return %c0_i32, %c0_i32_0 : i32, i32
  }
  func.func @transform_6(%arg0: i32) -> (i32, i32) {
    %c0_i32 = arith.constant 0 : i32
    %c0_i32_0 = arith.constant 0 : i32
    %c0_i32_1 = arith.constant 0 : i32
    return %c0_i32, %c0_i32_0 : i32, i32
  }
  func.func @transform_7(%arg0: i32) -> (i32, i32) {
    %c0_i32 = arith.constant 0 : i32
    %c0_i32_0 = arith.constant 0 : i32
    %c0_i32_1 = arith.constant 0 : i32
    return %c0_i32, %c0_i32_0 : i32, i32
  }
}

</mosaic_0001>

<llo_original>
// kernel: tpu_custom_call.1
$region0: #{tpu_custom_call.1}
  #allocation0 [shape = 'u32[]', space=smem, size = 0x4, offset = 0x4, fixed_abs, tag = 'smem constant byte address 0x4 - core index']
  #allocation1 [shape = 'u32[72,128]{1,0:T(1,128)}', space=vmem, size = 0x9000, scoped, tag = 'internal scratch']
  #allocation2 [shape = 'f32[64,32]{1,0:T(8,128)}', space=vmem, size = 0x8000, scoped, tag = 'scratch operand']
  %s0 = inlined_call_operand.vmem [shape: bf16[64,19], index: 0, kind: input, shape index: {}]
  %s1 = inlined_call_operand.vmem [shape: f32[8,64], index: 1, kind: input, shape index: {}]
  %s2 = inlined_call_operand.hbm [shape: bf16[19,33], index: 2, kind: input, shape index: {}]
  %s3 = inlined_call_operand.vmem [shape: bf16[33,128], index: 3, kind: input, shape index: {}]
  %s4 = inlined_call_operand.vmem [shape: bf16[32,128], index: 4, kind: input, shape index: {}]
  %s5 = inlined_call_operand.hbm [shape: bf16[32,128], index: 5, kind: input, shape index: {}]
  %s6 = inlined_call_operand.vmem [shape: f32[1,128], index: 6, kind: input, shape index: {}]
  %s7 = inlined_call_operand.hbm [shape: f32[72,128], index: 7, kind: output, shape index: {}]
  %s8 = sld [smem:[#allocation0]]
  $region46: #{tpu_custom_call.1} parent=0
    _
  %s10 = ssub.s32 1, %s8
  %s11 = scalar_select 0, %s10, %s8
  $region1: #{tpu_custom_call.1} parent=0
    #allocation3 [shape = 'u8[6144]{0}', space=vmem, size = 0x1800, scoped, tag = 'input window, operand 2, single buffered']
    #allocation4 [shape = 's32[1]{0}', space=sflag, size = 0x4, scoped, tag = 'scoped memory for tpu_custom_call.1']
    #allocation5 [shape = 's32[1]{0}', space=sflag, size = 0x4, scoped, tag = 'scoped memory for tpu_custom_call.1']
    #allocation6 [shape = 'u8[8192]{0}', space=vmem, size = 0x2000, scoped, tag = 'input window, operand 5, single buffered']
    #allocation7 [shape = 's32[1]{0}', space=sflag, size = 0x4, scoped, tag = 'scoped memory for tpu_custom_call.1']
    #allocation8 [shape = 'u8[36864]{0}', space=vmem, size = 0x9000, scoped, tag = 'output window, operand 0, single buffered']
    %12 = vsyncpa [#allocation4], 0
    %13 = vsyncpa [#allocation7], 0
    %14 = vsyncpa [#allocation5], 0
    // Predicated region
    $region2: #{tpu_custom_call.1} parent=1 // pred_check
      _
    $region3: #{tpu_custom_call.1} parent=1 // pred_check_branch
      %16 = sbr.rel (0) target = $region5
    $region4: #{tpu_custom_call.1} parent=1 // pred_region
      _
    $region5: #{tpu_custom_call.1} parent=1 // pred_fallthru
      _
    // Predicated region
    $region6: #{tpu_custom_call.1} parent=1 // pred_check
      _
    $region7: #{tpu_custom_call.1} parent=1 // pred_check_branch
      %18 = sbr.rel (0) target = $region9
    $region8: #{tpu_custom_call.1} parent=1 // pred_region
      _
    $region9: #{tpu_custom_call.1} parent=1 // pred_fallthru
      _
    // Predicated region
    $region10: #{tpu_custom_call.1} parent=1 // pred_check
      _
    $region11: #{tpu_custom_call.1} parent=1 // pred_check_branch
      %20 = sbr.rel (0) target = $region13
    $region12: #{tpu_custom_call.1} parent=1 // pred_region
      %22 = vsyncadd [#allocation4], 0
      %s23 = sshll.u32 %s2, 4
      %s24 = int_to_ptr.hbm [resolvable:$true] %s23
      %s25 = sshll.u32 [#allocation3], 4
      %s26 = int_to_ptr.vmem [resolvable:$true] %s25
      %31 = dma.hbm_to_vmem [thread:$0]  %s24, 192, %s26, [#allocation4], 64, 64, 4
    $region13: #{tpu_custom_call.1} parent=1 // pred_fallthru
      _
    // Predicated region
    $region14: #{tpu_custom_call.1} parent=1 // pred_check
      _
    $region15: #{tpu_custom_call.1} parent=1 // pred_check_branch
      %33 = sbr.rel (0) target = $region17
    $region16: #{tpu_custom_call.1} parent=1 // pred_region
      _
    $region17: #{tpu_custom_call.1} parent=1 // pred_fallthru
      _
    // Predicated region
    $region18: #{tpu_custom_call.1} parent=1 // pred_check
      _
    $region19: #{tpu_custom_call.1} parent=1 // pred_check_branch
      %35 = sbr.rel (0) target = $region21
    $region20: #{tpu_custom_call.1} parent=1 // pred_region
      _
    $region21: #{tpu_custom_call.1} parent=1 // pred_fallthru
      _
    // Predicated region
    $region22: #{tpu_custom_call.1} parent=1 // pred_check
      _
    $region23: #{tpu_custom_call.1} parent=1 // pred_check_branch
      %37 = sbr.rel (0) target = $region25
    $region24: #{tpu_custom_call.1} parent=1 // pred_region
      %39 = vsyncadd [#allocation7], 0
      %s40 = sshll.u32 %s5, 4
      %s41 = int_to_ptr.hbm [resolvable:$true] %s40
      %s42 = sshll.u32 [#allocation6], 4
      %s43 = int_to_ptr.vmem [resolvable:$true] %s42
      %48 = dma.hbm_to_vmem [thread:$0]  %s41, 256, %s43, [#allocation7], 64, 64, 4
    $region25: #{tpu_custom_call.1} parent=1 // pred_fallthru
      _
    // Predicated region
    $region26: #{tpu_custom_call.1} parent=1 // pred_check
      _
    $region27: #{tpu_custom_call.1} parent=1 // pred_check_branch
      %50 = sbr.rel (0) target = $region29
    $region28: #{tpu_custom_call.1} parent=1 // pred_region
      _
    $region29: #{tpu_custom_call.1} parent=1 // pred_fallthru
      _
    // Predicated region
    $region30: #{tpu_custom_call.1} parent=1 // pred_check
      _
    $region31: #{tpu_custom_call.1} parent=1 // pred_check_branch
      %52 = sbr.rel (0) target = $region33
    $region32: #{tpu_custom_call.1} parent=1 // pred_region
      %54 = dma.done [#allocation4], 192
    $region33: #{tpu_custom_call.1} parent=1 // pred_fallthru
      _
    // Predicated region
    $region34: #{tpu_custom_call.1} parent=1 // pred_check
      _
    $region35: #{tpu_custom_call.1} parent=1 // pred_check_branch
      %56 = sbr.rel (0) target = $region37
    $region36: #{tpu_custom_call.1} parent=1 // pred_region
      %58 = dma.done [#allocation7], 256
    $region37: #{tpu_custom_call.1} parent=1 // pred_fallthru
      _
    %v60 = vld [vmem:[%s0] sm:$0xf]
    %v61 = vld [vmem:[%s0 + $0x4] sm:$0xf]
    %v62 = vld [vmem:[%s0 + $0x8] sm:$0xf]
    %v63 = vld [vmem:[%s0 + $0xc] sm:$0xf]
    %v64 = vld [vmem:[%s0 + $0x10] sm:$0xf]
    %v65 = vld [vmem:[%s0 + $0x14] sm:$0xf]
    %v66 = vld [vmem:[%s0 + $0x18] sm:$0xf]
    %v67 = vld [vmem:[%s0 + $0x1c] sm:$0xf]
    %v68 = vld [vmem:[#allocation3] sm:$0xf]
    %v69 = vld [vmem:[#allocation3 + $0x4] sm:$0xf]
    %v70 = vld [vmem:[#allocation3 + $0x8] sm:$0x3]
    %v79 = vunpack.c.l.b16 %v60
    %v80 = vunpack.c.l.b16 %v61
    %v81 = vunpack.c.l.b16 %v62
    %v82 = vunpack.c.l.b16 %v63
    %v83 = vunpack.c.l.b16 %v64
    %v84 = vunpack.c.l.b16 %v65
    %v85 = vunpack.c.l.b16 %v66
    %v86 = vunpack.c.l.b16 %v67
    %v87 = vpack.c.b16 %v80, %v79
    %v88 = vpack.c.b16 %v82, %v81
    %v89 = vpack.c.b16 %v84, %v83
    %v90 = vpack.c.b16 %v86, %v85
    %v94 = vunpack.c.l.b16 %v68
    %v95 = vunpack.c.l.b16 %v69
    %v96 = vunpack.c.l.b16 %v70
    %v97 = vpack.c.b16 %v95, %v94
    %v98 = vpack.c.b16 %v96, %v96
    %vm100 = vcmask 154624
    %v102 = vsel %vm100, %v87, 0
    %v105 = vsel %vm100, %v88, 0
    %v108 = vsel %vm100, %v89, 0
    %v111 = vsel %vm100, %v90, 0
    %vm113 = vcmask 1040384
    %vm114 = vcmask 1041408
    %v115 = vsel %vm113, 4294967295, 65535
    %v116 = vsel %vm114, %v115, 0
    %v118 = vand.u32 %v98, %v116
    %120 = vmatpush.bf16.msra.mxu0 0
    %121 = vmatpush.bf16.msra.mxu0 0
    %122 = vmatpush.bf16.msra.mxu0 0
    %123 = vmatpush.bf16.msra.mxu0 0
    %124 = vmatpush.bf16.msra.mxu0 0
    %125 = vmatpush.bf16.msra.mxu0 0
    %126 = vmatpush.bf16.msra.mxu0 %v118
    %127 = vmatpush.bf16.msra.mxu0 %v97
    %128 = vmatmul.bf16.gmra.mxu0 %v102
    %v129 = vpop.f32.mrf.mxu0
    %v130 = vadd.f32 0.0, %v129
    %v131 = vpop.f32.mrf.mxu0
    %v132 = vadd.f32 0.0, %v131
    %133 = vmatmul.bf16.gmra.mxu0 %v105
    %v134 = vpop.f32.mrf.mxu0
    %v135 = vadd.f32 0.0, %v134
    %v136 = vpop.f32.mrf.mxu0
    %v137 = vadd.f32 0.0, %v136
    %138 = vmatmul.bf16.gmra.mxu0 %v108
    %v139 = vpop.f32.mrf.mxu0
    %v140 = vadd.f32 0.0, %v139
    %v141 = vpop.f32.mrf.mxu0
    %v142 = vadd.f32 0.0, %v141
    %143 = vmatmul.bf16.gmra.mxu0 %v111
    %v144 = vpop.f32.mrf.mxu0
    %v145 = vadd.f32 0.0, %v144
    %v146 = vpop.f32.mrf.mxu0
    %v147 = vadd.f32 0.0, %v146
    %148 = vdwg.mxu0
    %v149 = vmax.f32 %v130, 0.0
    %v150 = vmax.f32 %v132, 0.0
    %v151 = vmax.f32 %v135, 0.0
    %v152 = vmax.f32 %v137, 0.0
    %v153 = vmax.f32 %v140, 0.0
    %v154 = vmax.f32 %v142, 0.0
    %v155 = vmax.f32 %v145, 0.0
    %v156 = vmax.f32 %v147, 0.0
    %v157 = vpack.c.bf16 %v150, %v149
    %v158 = vpack.c.bf16 %v152, %v151
    %v159 = vpack.c.bf16 %v154, %v153
    %v160 = vpack.c.bf16 %v156, %v155
    %v161 = vld [vmem:[%s3] sm:$0xf]
    %v162 = vld [vmem:[%s3 + $0x4] sm:$0xf]
    %v163 = vld [vmem:[%s3 + $0x8] sm:$0xf]
    %v164 = vld [vmem:[%s3 + $0xc] sm:$0xf]
    %v165 = vld [vmem:[%s3 + $0x10] sm:$0x1]
    %v171 = vunpack.c.l.b16 %v161
    %v172 = vunpack.c.l.b16 %v162
    %v173 = vunpack.c.l.b16 %v163
    %v174 = vunpack.c.l.b16 %v164
    %v175 = vunpack.c.l.b16 %v165
    %v176 = vpack.c.b16 %v172, %v171
    %v177 = vpack.c.b16 %v174, %v173
    %v178 = vpack.c.b16 %v175, %v175
    %vm181 = vcmask 269312
    %v183 = vsel %vm181, %v157, 0
    %v186 = vsel %vm181, %v158, 0
    %v189 = vsel %vm181, %v159, 0
    %v192 = vsel %vm181, %v160, 0
    %v194 = vsel 0, 4294967295, 65535
    %v195 = vsel %vm113, %v194, 0
    %v197 = vand.u32 %v178, %v195
    %199 = vmatpush.bf16.msra.mxu0 0
    %200 = vmatpush.bf16.msra.mxu0 0
    %201 = vmatpush.bf16.msra.mxu0 0
    %202 = vmatpush.bf16.msra.mxu0 0
    %203 = vmatpush.bf16.msra.mxu0 0
    %204 = vmatpush.bf16.msra.mxu0 %v197
    %205 = vmatpush.bf16.msra.mxu0 %v177
    %206 = vmatpush.bf16.msra.mxu0 %v176
    %207 = vmatmul.bf16.gmra.mxu0 %v183
    %v208 = vpop.f32.mrf.mxu0
    %v209 = vadd.f32 0.0, %v208
    %v210 = vpop.f32.mrf.mxu0
    %v211 = vadd.f32 0.0, %v210
    %212 = vmatmul.bf16.gmra.mxu0 %v186
    %v213 = vpop.f32.mrf.mxu0
    %v214 = vadd.f32 0.0, %v213
    %v215 = vpop.f32.mrf.mxu0
    %v216 = vadd.f32 0.0, %v215
    %217 = vmatmul.bf16.gmra.mxu0 %v189
    %v218 = vpop.f32.mrf.mxu0
    %v219 = vadd.f32 0.0, %v218
    %v220 = vpop.f32.mrf.mxu0
    %v221 = vadd.f32 0.0, %v220
    %222 = vmatmul.bf16.gmra.mxu0 %v192
    %v223 = vpop.f32.mrf.mxu0
    %v224 = vadd.f32 0.0, %v223
    %v225 = vpop.f32.mrf.mxu0
    %v226 = vadd.f32 0.0, %v225
    %227 = vdwg.mxu0
    %v228 = vld [vmem:[%s4] sm:$0xf]
    %v229 = vld [vmem:[%s4 + $0x4] sm:$0xf]
    %v230 = vld [vmem:[%s4 + $0x8] sm:$0xf]
    %v231 = vld [vmem:[%s4 + $0xc] sm:$0xf]
    %v232 = vld [vmem:[%s1] sm:$0xff]
    %v233 = vpack.c.bf16 %v232, %v232
    %v238 = vunpack.c.l.b16 %v228
    %v239 = vunpack.c.l.b16 %v229
    %v240 = vunpack.c.l.b16 %v230
    %v241 = vunpack.c.l.b16 %v231
    %v242 = vpack.c.b16 %v239, %v238
    %v243 = vpack.c.b16 %v241, %v240
    %vm246 = vcmask 261120
    %v248 = vsel %vm246, %v233, 0
    %250 = vmatpush.bf16.msra.mxu0 0
    %251 = vmatpush.bf16.msra.mxu0 0
    %252 = vmatpush.bf16.msra.mxu0 0
    %253 = vmatpush.bf16.msra.mxu0 0
    %254 = vmatpush.bf16.msra.mxu0 0
    %255 = vmatpush.bf16.msra.mxu0 0
    %256 = vmatpush.bf16.msra.mxu0 %v243
    %257 = vmatpush.bf16.msra.mxu0 %v242
    %258 = vmatmul.bf16.gmra.mxu0 %v248
    %v259 = vpop.f32.mrf.mxu0
    %v260 = vadd.f32 0.0, %v259
    %v261 = vpop.f32.mrf.mxu0
    %262 = vdwg.mxu0
    %v263 = vadd.f32 %v209, %v260
    %v264 = vxor.u32 %v263, 2147483648
    %v265 = vmul.f32 %v264, 1.442695
    %v266 = vpow.pop %v265
    %v267 = vadd.f32 %v266, 1.0
    %v268 = vrcp.pop %v267
    %v269 = vmul.f32 %v267, %v268
    %v270 = vsub.f32 1.0, %v269
    %v271 = vmul.f32 %v268, %v270
    %v272 = vadd.f32 %v268, %v271
    %vm273 = vweird.f32 %v267
    %vm274 = vweird.f32 %v268
    %vm275 = vmor %vm273, %vm274
    %v276 = vsel %vm275, %v268, %v272
    %v277 = vand.u32 2147483647, %v267
    %vm278 = vcmp.eq.f32.partialorder %v277, 8.507059e+37
    %v279 = vand.u32 %v267, 2147483648
    %v280 = vor.u32 1.1754944e-38, %v279
    %v281 = vsel %vm278, %v280, %v276
    %v282 = vmul.f32 1.0, %v281
    %v283 = vtanh.pop %v263
    %v284 = vmul.f32 %v282, %v232
    %286 = vrot.lane.b32.xlu0 %v283, 32
    %v287 = vpop.permute.xlu0 %286
    %v289 = vmul.f32 %v282, %v287
    %291 = vrot.lane.b32.xlu0 %v289, 32
    %v292 = vpop.permute.xlu0 %291
    %v294 = vadd.f32 %v284, %v292
    %v295 = vtanh.pop %v294
    %297 = vrot.lane.b32.xlu0 %v295, 32
    %v298 = vpop.permute.xlu0 %297
    %v300 = vmul.f32 %v282, %v298
    %v301 = vpack.c.bf16 %v300, %v300
    %303 = vrot.lane.b32.xlu0 %v300, 64
    %v304 = vpop.permute.xlu0 %303
    %306 = vst.msk [vmem:[#allocation2] sm:$0xff] %vm246, %v304
    %308 = vrot.lane.b32.xlu0 %v301, 64
    %v309 = vpop.permute.xlu0 %308
    %v311 = vsel %vm246, %v309, 0
    %313 = vmatpush.bf16.msra.mxu0 0
    %314 = vmatpush.bf16.msra.mxu0 0
    %315 = vmatpush.bf16.msra.mxu0 0
    %316 = vmatpush.bf16.msra.mxu0 0
    %317 = vmatpush.bf16.msra.mxu0 0
    %318 = vmatpush.bf16.msra.mxu0 0
    %319 = vmatpush.bf16.msra.mxu0 %v243
    %320 = vmatpush.bf16.msra.mxu0 %v242
    %321 = vmatmul.bf16.gmra.mxu0 %v311
    %v322 = vpop.f32.mrf.mxu0
    %v323 = vadd.f32 0.0, %v322
    %v324 = vpop.f32.mrf.mxu0
    %325 = vdwg.mxu0
    %v326 = vadd.f32 %v211, %v323
    %v327 = vxor.u32 %v326, 2147483648
    %v328 = vmul.f32 %v327, 1.442695
    %v329 = vpow.pop %v328
    %v330 = vadd.f32 %v329, 1.0
    %v331 = vrcp.pop %v330
    %v332 = vmul.f32 %v330, %v331
    %v333 = vsub.f32 1.0, %v332
    %v334 = vmul.f32 %v331, %v333
    %v335 = vadd.f32 %v331, %v334
    %vm336 = vweird.f32 %v330
    %vm337 = vweird.f32 %v331
    %vm338 = vmor %vm336, %vm337
    %v339 = vsel %vm338, %v331, %v335
    %v340 = vand.u32 2147483647, %v330
    %vm341 = vcmp.eq.f32.partialorder %v340, 8.507059e+37
    %v342 = vand.u32 %v330, 2147483648
    %v343 = vor.u32 1.1754944e-38, %v342
    %v344 = vsel %vm341, %v343, %v339
    %v345 = vmul.f32 1.0, %v344
    %v346 = vtanh.pop %v326
    %v347 = vmul.f32 %v345, %v294
    %349 = vrot.lane.b32.xlu0 %v346, 32
    %v350 = vpop.permute.xlu0 %349
    %v352 = vmul.f32 %v345, %v350
    %354 = vrot.lane.b32.xlu0 %v352, 32
    %v355 = vpop.permute.xlu0 %354
    %v357 = vadd.f32 %v347, %v355
    %v358 = vtanh.pop %v357
    %360 = vrot.lane.b32.xlu0 %v358, 32
    %v361 = vpop.permute.xlu0 %360
    %v363 = vmul.f32 %v345, %v361
    %v364 = vpack.c.bf16 %v363, %v363
    %366 = vrot.lane.b32.xlu0 %v363, 64
    %v367 = vpop.permute.xlu0 %366
    %369 = vst.msk [vmem:[#allocation2 + $0x8] sm:$0xff] %vm246, %v367
    %371 = vrot.lane.b32.xlu0 %v364, 64
    %v372 = vpop.permute.xlu0 %371
    %v374 = vsel %vm246, %v372, 0
    %376 = vmatpush.bf16.msra.mxu0 0
    %377 = vmatpush.bf16.msra.mxu0 0
    %378 = vmatpush.bf16.msra.mxu0 0
    %379 = vmatpush.bf16.msra.mxu0 0
    %380 = vmatpush.bf16.msra.mxu0 0
    %381 = vmatpush.bf16.msra.mxu0 0
    %382 = vmatpush.bf16.msra.mxu0 %v243
    %383 = vmatpush.bf16.msra.mxu0 %v242
    %384 = vmatmul.bf16.gmra.mxu0 %v374
    %v385 = vpop.f32.mrf.mxu0
    %v386 = vadd.f32 0.0, %v385
    %v387 = vpop.f32.mrf.mxu0
    %388 = vdwg.mxu0
    %v389 = vadd.f32 %v214, %v386
    %v390 = vxor.u32 %v389, 2147483648
    %v391 = vmul.f32 %v390, 1.442695
    %v392 = vpow.pop %v391
    %v393 = vadd.f32 %v392, 1.0
    %v394 = vrcp.pop %v393
    %v395 = vmul.f32 %v393, %v394
    %v396 = vsub.f32 1.0, %v395
    %v397 = vmul.f32 %v394, %v396
    %v398 = vadd.f32 %v394, %v397
    %vm399 = vweird.f32 %v393
    %vm400 = vweird.f32 %v394
    %vm401 = vmor %vm399, %vm400
    %v402 = vsel %vm401, %v394, %v398
    %v403 = vand.u32 2147483647, %v393
    %vm404 = vcmp.eq.f32.partialorder %v403, 8.507059e+37
    %v405 = vand.u32 %v393, 2147483648
    %v406 = vor.u32 1.1754944e-38, %v405
    %v407 = vsel %vm404, %v406, %v402
    %v408 = vmul.f32 1.0, %v407
    %v409 = vtanh.pop %v389
    %v410 = vmul.f32 %v408, %v357
    %412 = vrot.lane.b32.xlu0 %v409, 32
    %v413 = vpop.permute.xlu0 %412
    %v415 = vmul.f32 %v408, %v413
    %417 = vrot.lane.b32.xlu0 %v415, 32
    %v418 = vpop.permute.xlu0 %417
    %v420 = vadd.f32 %v410, %v418
    %v421 = vtanh.pop %v420
    %423 = vrot.lane.b32.xlu0 %v421, 32
    %v424 = vpop.permute.xlu0 %423
    %v426 = vmul.f32 %v408, %v424
    %v427 = vpack.c.bf16 %v426, %v426
    %429 = vrot.lane.b32.xlu0 %v426, 64
    %v430 = vpop.permute.xlu0 %429
    %432 = vst.msk [vmem:[#allocation2 + $0x10] sm:$0xff] %vm246, %v430
    %434 = vrot.lane.b32.xlu0 %v427, 64
    %v435 = vpop.permute.xlu0 %434
    %v437 = vsel %vm246, %v435, 0
    %439 = vmatpush.bf16.msra.mxu0 0
    %440 = vmatpush.bf16.msra.mxu0 0
    %441 = vmatpush.bf16.msra.mxu0 0
    %442 = vmatpush.bf16.msra.mxu0 0
    %443 = vmatpush.bf16.msra.mxu0 0
    %444 = vmatpush.bf16.msra.mxu0 0
    %445 = vmatpush.bf16.msra.mxu0 %v243
    %446 = vmatpush.bf16.msra.mxu0 %v242
    %447 = vmatmul.bf16.gmra.mxu0 %v437
    %v448 = vpop.f32.mrf.mxu0
    %v449 = vadd.f32 0.0, %v448
    %v450 = vpop.f32.mrf.mxu0
    %451 = vdwg.mxu0
    %v452 = vadd.f32 %v216, %v449
    %v453 = vxor.u32 %v452, 2147483648
    %v454 = vmul.f32 %v453, 1.442695
    %v455 = vpow.pop %v454
    %v456 = vadd.f32 %v455, 1.0
    %v457 = vrcp.pop %v456
    %v458 = vmul.f32 %v456, %v457
    %v459 = vsub.f32 1.0, %v458
    %v460 = vmul.f32 %v457, %v459
    %v461 = vadd.f32 %v457, %v460
    %vm462 = vweird.f32 %v456
    %vm463 = vweird.f32 %v457
    %vm464 = vmor %vm462, %vm463
    %v465 = vsel %vm464, %v457, %v461
    %v466 = vand.u32 2147483647, %v456
    %vm467 = vcmp.eq.f32.partialorder %v466, 8.507059e+37
    %v468 = vand.u32 %v456, 2147483648
    %v469 = vor.u32 1.1754944e-38, %v468
    %v470 = vsel %vm467, %v469, %v465
    %v471 = vmul.f32 1.0, %v470
    %v472 = vtanh.pop %v452
    %v473 = vmul.f32 %v471, %v420
    %475 = vrot.lane.b32.xlu0 %v472, 32
    %v476 = vpop.permute.xlu0 %475
    %v478 = vmul.f32 %v471, %v476
    %480 = vrot.lane.b32.xlu0 %v478, 32
    %v481 = vpop.permute.xlu0 %480
    %v483 = vadd.f32 %v473, %v481
    %v484 = vtanh.pop %v483
    %486 = vrot.lane.b32.xlu0 %v484, 32
    %v487 = vpop.permute.xlu0 %486
    %v489 = vmul.f32 %v471, %v487
    %v490 = vpack.c.bf16 %v489, %v489
    %492 = vrot.lane.b32.xlu0 %v489, 64
    %v493 = vpop.permute.xlu0 %492
    %495 = vst.msk [vmem:[#allocation2 + $0x18] sm:$0xff] %vm246, %v493
    %497 = vrot.lane.b32.xlu0 %v490, 64
    %v498 = vpop.permute.xlu0 %497
    %v500 = vsel %vm246, %v498, 0
    %502 = vmatpush.bf16.msra.mxu0 0
    %503 = vmatpush.bf16.msra.mxu0 0
    %504 = vmatpush.bf16.msra.mxu0 0
    %505 = vmatpush.bf16.msra.mxu0 0
    %506 = vmatpush.bf16.msra.mxu0 0
    %507 = vmatpush.bf16.msra.mxu0 0
    %508 = vmatpush.bf16.msra.mxu0 %v243
    %509 = vmatpush.bf16.msra.mxu0 %v242
    %510 = vmatmul.bf16.gmra.mxu0 %v500
    %v511 = vpop.f32.mrf.mxu0
    %v512 = vadd.f32 0.0, %v511
    %v513 = vpop.f32.mrf.mxu0
    %514 = vdwg.mxu0
    %v515 = vadd.f32 %v219, %v512
    %v516 = vxor.u32 %v515, 2147483648
    %v517 = vmul.f32 %v516, 1.442695
    %v518 = vpow.pop %v517
    %v519 = vadd.f32 %v518, 1.0
    %v520 = vrcp.pop %v519
    %v521 = vmul.f32 %v519, %v520
    %v522 = vsub.f32 1.0, %v521
    %v523 = vmul.f32 %v520, %v522
    %v524 = vadd.f32 %v520, %v523
    %vm525 = vweird.f32 %v519
    %vm526 = vweird.f32 %v520
    %vm527 = vmor %vm525, %vm526
    %v528 = vsel %vm527, %v520, %v524
    %v529 = vand.u32 2147483647, %v519
    %vm530 = vcmp.eq.f32.partialorder %v529, 8.507059e+37
    %v531 = vand.u32 %v519, 2147483648
    %v532 = vor.u32 1.1754944e-38, %v531
    %v533 = vsel %vm530, %v532, %v528
    %v534 = vmul.f32 1.0, %v533
    %v535 = vtanh.pop %v515
    %v536 = vmul.f32 %v534, %v483
    %538 = vrot.lane.b32.xlu0 %v535, 32
    %v539 = vpop.permute.xlu0 %538
    %v541 = vmul.f32 %v534, %v539
    %543 = vrot.lane.b32.xlu0 %v541, 32
    %v544 = vpop.permute.xlu0 %543
    %v546 = vadd.f32 %v536, %v544
    %v547 = vtanh.pop %v546
    %549 = vrot.lane.b32.xlu0 %v547, 32
    %v550 = vpop.permute.xlu0 %549
    %v552 = vmul.f32 %v534, %v550
    %v553 = vpack.c.bf16 %v552, %v552
    %555 = vrot.lane.b32.xlu0 %v552, 64
    %v556 = vpop.permute.xlu0 %555
    %558 = vst.msk [vmem:[#allocation2 + $0x20] sm:$0xff] %vm246, %v556
    %560 = vrot.lane.b32.xlu0 %v553, 64
    %v561 = vpop.permute.xlu0 %560
    %v563 = vsel %vm246, %v561, 0
    %565 = vmatpush.bf16.msra.mxu0 0
    %566 = vmatpush.bf16.msra.mxu0 0
    %567 = vmatpush.bf16.msra.mxu0 0
    %568 = vmatpush.bf16.msra.mxu0 0
    %569 = vmatpush.bf16.msra.mxu0 0
    %570 = vmatpush.bf16.msra.mxu0 0
    %571 = vmatpush.bf16.msra.mxu0 %v243
    %572 = vmatpush.bf16.msra.mxu0 %v242
    %573 = vmatmul.bf16.gmra.mxu0 %v563
    %v574 = vpop.f32.mrf.mxu0
    %v575 = vadd.f32 0.0, %v574
    %v576 = vpop.f32.mrf.mxu0
    %577 = vdwg.mxu0
    %v578 = vadd.f32 %v221, %v575
    %v579 = vxor.u32 %v578, 2147483648
    %v580 = vmul.f32 %v579, 1.442695
    %v581 = vpow.pop %v580
    %v582 = vadd.f32 %v581, 1.0
    %v583 = vrcp.pop %v582
    %v584 = vmul.f32 %v582, %v583
    %v585 = vsub.f32 1.0, %v584
    %v586 = vmul.f32 %v583, %v585
    %v587 = vadd.f32 %v583, %v586
    %vm588 = vweird.f32 %v582
    %vm589 = vweird.f32 %v583
    %vm590 = vmor %vm588, %vm589
    %v591 = vsel %vm590, %v583, %v587
    %v592 = vand.u32 2147483647, %v582
    %vm593 = vcmp.eq.f32.partialorder %v592, 8.507059e+37
    %v594 = vand.u32 %v582, 2147483648
    %v595 = vor.u32 1.1754944e-38, %v594
    %v596 = vsel %vm593, %v595, %v591
    %v597 = vmul.f32 1.0, %v596
    %v598 = vtanh.pop %v578
    %v599 = vmul.f32 %v597, %v546
    %601 = vrot.lane.b32.xlu0 %v598, 32
    %v602 = vpop.permute.xlu0 %601
    %v604 = vmul.f32 %v597, %v602
    %606 = vrot.lane.b32.xlu0 %v604, 32
    %v607 = vpop.permute.xlu0 %606
    %v609 = vadd.f32 %v599, %v607
    %v610 = vtanh.pop %v609
    %612 = vrot.lane.b32.xlu0 %v610, 32
    %v613 = vpop.permute.xlu0 %612
    %v615 = vmul.f32 %v597, %v613
    %v616 = vpack.c.bf16 %v615, %v615
    %618 = vrot.lane.b32.xlu0 %v615, 64
    %v619 = vpop.permute.xlu0 %618
    %621 = vst.msk [vmem:[#allocation2 + $0x28] sm:$0xff] %vm246, %v619
    %623 = vrot.lane.b32.xlu0 %v616, 64
    %v624 = vpop.permute.xlu0 %623
    %v626 = vsel %vm246, %v624, 0
    %628 = vmatpush.bf16.msra.mxu0 0
    %629 = vmatpush.bf16.msra.mxu0 0
    %630 = vmatpush.bf16.msra.mxu0 0
    %631 = vmatpush.bf16.msra.mxu0 0
    %632 = vmatpush.bf16.msra.mxu0 0
    %633 = vmatpush.bf16.msra.mxu0 0
    %634 = vmatpush.bf16.msra.mxu0 %v243
    %635 = vmatpush.bf16.msra.mxu0 %v242
    %636 = vmatmul.bf16.gmra.mxu0 %v626
    %v637 = vpop.f32.mrf.mxu0
    %v638 = vadd.f32 0.0, %v637
    %v639 = vpop.f32.mrf.mxu0
    %640 = vdwg.mxu0
    %v641 = vadd.f32 %v224, %v638
    %v642 = vxor.u32 %v641, 2147483648
    %v643 = vmul.f32 %v642, 1.442695
    %v644 = vpow.pop %v643
    %v645 = vadd.f32 %v644, 1.0
    %v646 = vrcp.pop %v645
    %v647 = vmul.f32 %v645, %v646
    %v648 = vsub.f32 1.0, %v647
    %v649 = vmul.f32 %v646, %v648
    %v650 = vadd.f32 %v646, %v649
    %vm651 = vweird.f32 %v645
    %vm652 = vweird.f32 %v646
    %vm653 = vmor %vm651, %vm652
    %v654 = vsel %vm653, %v646, %v650
    %v655 = vand.u32 2147483647, %v645
    %vm656 = vcmp.eq.f32.partialorder %v655, 8.507059e+37
    %v657 = vand.u32 %v645, 2147483648
    %v658 = vor.u32 1.1754944e-38, %v657
    %v659 = vsel %vm656, %v658, %v654
    %v660 = vmul.f32 1.0, %v659
    %v661 = vtanh.pop %v641
    %v662 = vmul.f32 %v660, %v609
    %664 = vrot.lane.b32.xlu0 %v661, 32
    %v665 = vpop.permute.xlu0 %664
    %v667 = vmul.f32 %v660, %v665
    %669 = vrot.lane.b32.xlu0 %v667, 32
    %v670 = vpop.permute.xlu0 %669
    %v672 = vadd.f32 %v662, %v670
    %v673 = vtanh.pop %v672
    %675 = vrot.lane.b32.xlu0 %v673, 32
    %v676 = vpop.permute.xlu0 %675
    %v678 = vmul.f32 %v660, %v676
    %v679 = vpack.c.bf16 %v678, %v678
    %681 = vrot.lane.b32.xlu0 %v678, 64
    %v682 = vpop.permute.xlu0 %681
    %684 = vst.msk [vmem:[#allocation2 + $0x30] sm:$0xff] %vm246, %v682
    %686 = vrot.lane.b32.xlu0 %v679, 64
    %v687 = vpop.permute.xlu0 %686
    %v689 = vsel %vm246, %v687, 0
    %691 = vmatpush.bf16.msra.mxu0 0
    %692 = vmatpush.bf16.msra.mxu0 0
    %693 = vmatpush.bf16.msra.mxu0 0
    %694 = vmatpush.bf16.msra.mxu0 0
    %695 = vmatpush.bf16.msra.mxu0 0
    %696 = vmatpush.bf16.msra.mxu0 0
    %697 = vmatpush.bf16.msra.mxu0 %v243
    %698 = vmatpush.bf16.msra.mxu0 %v242
    %699 = vmatmul.bf16.gmra.mxu0 %v689
    %v700 = vpop.f32.mrf.mxu0
    %v701 = vadd.f32 0.0, %v700
    %v702 = vpop.f32.mrf.mxu0
    %703 = vdwg.mxu0
    %v704 = vadd.f32 %v226, %v701
    %v705 = vxor.u32 %v704, 2147483648
    %v706 = vmul.f32 %v705, 1.442695
    %v707 = vpow.pop %v706
    %v708 = vadd.f32 %v707, 1.0
    %v709 = vrcp.pop %v708
    %v710 = vmul.f32 %v708, %v709
    %v711 = vsub.f32 1.0, %v710
    %v712 = vmul.f32 %v709, %v711
    %v713 = vadd.f32 %v709, %v712
    %vm714 = vweird.f32 %v708
    %vm715 = vweird.f32 %v709
    %vm716 = vmor %vm714, %vm715
    %v717 = vsel %vm716, %v709, %v713
    %v718 = vand.u32 2147483647, %v708
    %vm719 = vcmp.eq.f32.partialorder %v718, 8.507059e+37
    %v720 = vand.u32 %v708, 2147483648
    %v721 = vor.u32 1.1754944e-38, %v720
    %v722 = vsel %vm719, %v721, %v717
    %v723 = vmul.f32 1.0, %v722
    %v724 = vtanh.pop %v704
    %v725 = vmul.f32 %v723, %v672
    %727 = vrot.lane.b32.xlu0 %v724, 32
    %v728 = vpop.permute.xlu0 %727
    %v730 = vmul.f32 %v723, %v728
    %732 = vrot.lane.b32.xlu0 %v730, 32
    %v733 = vpop.permute.xlu0 %732
    %v735 = vadd.f32 %v725, %v733
    %v736 = vtanh.pop %v735
    %738 = vrot.lane.b32.xlu0 %v736, 32
    %v739 = vpop.permute.xlu0 %738
    %v741 = vmul.f32 %v723, %v739
    %743 = vrot.lane.b32.xlu0 %v741, 64
    %v744 = vpop.permute.xlu0 %743
    %746 = vst.msk [vmem:[#allocation2 + $0x38] sm:$0xff] %vm246, %v744
    %v747 = vld [vmem:[#allocation2] sm:$0xff]
    %v748 = vld [vmem:[#allocation2 + $0x8] sm:$0xff]
    %v749 = vld [vmem:[#allocation2 + $0x10] sm:$0xff]
    %v750 = vld [vmem:[#allocation2 + $0x18] sm:$0xff]
    %v751 = vld [vmem:[#allocation2 + $0x20] sm:$0xff]
    %v752 = vld [vmem:[#allocation2 + $0x28] sm:$0xff]
    %v753 = vld [vmem:[#allocation2 + $0x30] sm:$0xff]
    %v754 = vld [vmem:[#allocation2 + $0x38] sm:$0xff]
    %v755 = vpack.c.bf16 %v748, %v747
    %v756 = vpack.c.bf16 %v750, %v749
    %v757 = vpack.c.bf16 %v752, %v751
    %v758 = vpack.c.bf16 %v754, %v753
    %v759 = vld [vmem:[#allocation6] sm:$0xf]
    %v760 = vld [vmem:[#allocation6 + $0x4] sm:$0xf]
    %v761 = vld [vmem:[#allocation6 + $0x8] sm:$0xf]
    %v762 = vld [vmem:[#allocation6 + $0xc] sm:$0xf]
    %v763 = vld [vmem:[%s6] sm:$0x1]
    %v765 = vperm.slane %v763, 0
    %v771 = vunpack.c.l.b16 %v759
    %v772 = vunpack.c.l.b16 %v760
    %v773 = vunpack.c.l.b16 %v761
    %v774 = vunpack.c.l.b16 %v762
    %v775 = vpack.c.b16 %v772, %v771
    %v776 = vpack.c.b16 %v774, %v773
    %v780 = vsel %vm246, %v755, 0
    %v783 = vsel %vm246, %v756, 0
    %v786 = vsel %vm246, %v757, 0
    %v789 = vsel %vm246, %v758, 0
    %791 = vmatpush.bf16.msra.mxu0 0
    %792 = vmatpush.bf16.msra.mxu0 0
    %793 = vmatpush.bf16.msra.mxu0 0
    %794 = vmatpush.bf16.msra.mxu0 0
    %795 = vmatpush.bf16.msra.mxu0 0
    %796 = vmatpush.bf16.msra.mxu0 0
    %797 = vmatpush.bf16.msra.mxu0 %v776
    %798 = vmatpush.bf16.msra.mxu0 %v775
    %799 = vmatmul.bf16.gmra.mxu0 %v780
    %v800 = vpop.f32.mrf.mxu0
    %v801 = vadd.f32 %v765, %v800
    %v802 = vpop.f32.mrf.mxu0
    %v803 = vadd.f32 %v765, %v802
    %804 = vmatmul.bf16.gmra.mxu0 %v783
    %v805 = vpop.f32.mrf.mxu0
    %v806 = vadd.f32 %v765, %v805
    %v807 = vpop.f32.mrf.mxu0
    %v808 = vadd.f32 %v765, %v807
    %809 = vmatmul.bf16.gmra.mxu0 %v786
    %v810 = vpop.f32.mrf.mxu0
    %v811 = vadd.f32 %v765, %v810
    %v812 = vpop.f32.mrf.mxu0
    %v813 = vadd.f32 %v765, %v812
    %814 = vmatmul.bf16.gmra.mxu0 %v789
    %v815 = vpop.f32.mrf.mxu0
    %v816 = vadd.f32 %v765, %v815
    %v817 = vpop.f32.mrf.mxu0
    %v818 = vadd.f32 %v765, %v817
    %819 = vdwg.mxu0
    %820 = vst [vmem:[#allocation8] sm:$0xff] %v801
    %821 = vst [vmem:[#allocation8 + $0x8] sm:$0xff] %v803
    %822 = vst [vmem:[#allocation8 + $0x10] sm:$0xff] %v806
    %823 = vst [vmem:[#allocation8 + $0x18] sm:$0xff] %v808
    %824 = vst [vmem:[#allocation8 + $0x20] sm:$0xff] %v811
    %825 = vst [vmem:[#allocation8 + $0x28] sm:$0xff] %v813
    %826 = vst [vmem:[#allocation8 + $0x30] sm:$0xff] %v816
    %827 = vst [vmem:[#allocation8 + $0x38] sm:$0xff] %v818
    %v828 = vsel %vm246, %v744, %v735
    %vm829 = vcmask 523264
    %v830 = vsel %vm829, %v828, 0.0
    %831 = vst [vmem:[#allocation8 + $0x40] sm:$0xff] %v830
    // Predicated region
    $region38: #{tpu_custom_call.1} parent=1 // pred_check
      _
    $region39: #{tpu_custom_call.1} parent=1 // pred_check_branch
      %833 = sbr.rel (0) target = $region41
    $region40: #{tpu_custom_call.1} parent=1 // pred_region
      %835 = vsyncadd [#allocation5], 0
      %s836 = sshll.u32 [#allocation8], 4
      %s837 = int_to_ptr.vmem [resolvable:$true] %s836
      %s838 = sshll.u32 %s7, 4
      %s839 = int_to_ptr.hbm [resolvable:$true] %s838
      %844 = dma.vmem_to_hbm [thread:$0]  %s837, 1152, %s839, [#allocation5], 128, 128, 8
    $region41: #{tpu_custom_call.1} parent=1 // pred_fallthru
      _
    // Predicated region
    $region42: #{tpu_custom_call.1} parent=1 // pred_check
      _
    $region43: #{tpu_custom_call.1} parent=1 // pred_check_branch
      %846 = sbr.rel (0) target = $region45
    $region44: #{tpu_custom_call.1} parent=1 // pred_region
      %848 = dma.done [#allocation5], 1152
    $region45: #{tpu_custom_call.1} parent=1 // pred_fallthru
      _
    %849 = vsyncpa [#allocation4], 1
    %850 = vsyncpa [#allocation7], 1
    %851 = vsyncpa [#allocation5], 1

</llo_original>
